<compile_context>
chip_gen: v5e
topology: v5e:2x2
jax: 0.10.0
libtpu: 0.0.40
codegen_flags: <defaults>
</compile_context>

<pallas_src>
import functools

import jax
import jax.numpy as jnp
from jax import lax
from jax.experimental import pallas as pl
from jax.experimental.pallas import tpu as pltpu


def _round_up(x, m):
    return ((x + m - 1) // m) * m


# -----------------------------------------------------------------------------
# Fused kernel: two (3x3 SAME conv + bias + ReLU) layers for n_blk images per step.
# Layout inside the kernel: activations are (C, L) with L = n_blk*H*W
#   -> channels on sublanes, batch*spatial on lanes (lane-dense).
# Conv = one im2col matmul  (Cout, 9*Cin) @ (9*Cin, L)  on the MXU.
# -----------------------------------------------------------------------------
def fused_backbone_kernel(x_ref, m_ref, w1_ref, b1_ref, w2_ref, b2_ref, o_ref, *, W):
    # x_ref : (Cin_p, L)      activations, channels on sublanes, batch*spatial on lanes
    # m_ref : (9, 1, L)       precomputed f32 boundary masks, one per tap
    # w1_ref: (Cmid, 9*Cin_p) layer-1 weight, columns ordered (kh, kw, ci)
    # b1_ref: (Cmid, 1)
    # w2_ref: (Cout, 9*Cmid)
    # b2_ref: (Cout, 1)
    # o_ref : (Cout, L)       lane-dense output
    L = x_ref.shape[-1]
    taps = [(dh, dw) for dh in (-1, 0, 1) for dw in (-1, 0, 1)]

    def im2col(a):
        # a: (C, L) f32 -> (9*C, L); rows ordered tap-major (dh, dw), channel inner.
        cols = []
        for t, (dh, dw) in enumerate(taps):
            d = dh * W + dw
            if d == 0:
                s = a
            else:
                # out[p] = a[p + d] (circular over L). In-bounds taps never cross an
                # image boundary; out-of-bounds / wrap positions are exactly the ones
                # zeroed by the precomputed mask -> SAME zero padding.
                s = pltpu.roll(a, shift=(-d) % L, axis=1)
            cols.append(s * m_ref[t])  # (C, L) * (1, L) broadcast multiply
        return jnp.concatenate(cols, axis=0)

    x = x_ref[...].astype(jnp.float32)                                  # (Cin_p, L)

    # Layer 1: conv3x3 + bias + ReLU  (intermediate h stays on-chip)
    h = jnp.dot(w1_ref[...], im2col(x), preferred_element_type=jnp.float32)
    h = jnp.maximum(h + b1_ref[...], 0.0)                               # (Cmid, L)

    # Layer 2: conv3x3 + bias + ReLU
    y = jnp.dot(w2_ref[...], im2col(h), preferred_element_type=jnp.float32)
    y = jnp.maximum(y + b2_ref[...], 0.0)                               # (Cout, L)

    o_ref[...] = y.astype(o_ref.dtype)


# -----------------------------------------------------------------------------
# Synthetic backbone params + BackboneWrapper-equivalent forward.
# -----------------------------------------------------------------------------
def init_backbone_params(key, c_in=4, c_mid=8, c_out=16):
    k1, k2, k3, k4 = jax.random.split(key, 4)
    return {
        "w1": 0.1 * jax.random.normal(k1, (3, 3, c_in, c_mid), jnp.float32),   # HWIO
        "b1": 0.1 * jax.random.normal(k2, (c_mid,), jnp.float32),
        "w2": 0.1 * jax.random.normal(k3, (3, 3, c_mid, c_out), jnp.float32),  # HWIO
        "b2": 0.1 * jax.random.normal(k4, (c_out,), jnp.float32),
    }


@functools.partial(jax.jit, static_argnames=("images_per_block",))
def backbone_wrapper_forward(x_nchw, params, images_per_block=None):
    """Equivalent of BackboneWrapper.forward(x) = source_net.backbone(x) (NCHW in/out)."""
    N, C, H, W = x_nchw.shape
    HW = H * W
    c_mid = params["w1"].shape[-1]
    c_out = params["w2"].shape[-1]

    # --- choose how many images share one grid step (lane axis = n_blk * HW) -----
    if images_per_block is None:
        images_per_block = min(N, max(1, 2048 // HW))
        while N % images_per_block:
            images_per_block -= 1
    n_blk = images_per_block
    assert N % n_blk == 0, (N, n_blk)
    L = n_blk * HW
    num_blocks = N // n_blk

    # --- pad channel dims to sublane multiples of 8 ------------------------------
    c_in_p = _round_up(C, 8)
    c_mid_p = _round_up(c_mid, 8)
    c_out_p = _round_up(c_out, 8)

    x_pad = jnp.pad(x_nchw, ((0, 0), (0, c_in_p - C), (0, 0), (0, 0)))
    w1 = jnp.pad(params["w1"], ((0, 0), (0, 0), (0, c_in_p - C), (0, c_mid_p - c_mid)))
    b1 = jnp.pad(params["b1"], ((0, c_mid_p - c_mid),))
    w2 = jnp.pad(params["w2"], ((0, 0), (0, 0), (0, c_mid_p - c_mid), (0, c_out_p - c_out)))
    b2 = jnp.pad(params["b2"], ((0, c_out_p - c_out),))

    # HWIO (3,3,Ci,Co) -> (Co, 9*Ci); column order (kh, kw, ci) matches im2col rows.
    w1_2d = w1.reshape(9 * c_in_p, c_mid_p).T
    w2_2d = w2.reshape(9 * c_mid_p, c_out_p).T
    b1_2d = b1.reshape(c_mid_p, 1)
    b2_2d = b2.reshape(c_out_p, 1)

    # --- lay activations out channel-major: (C, N*HW) (layout plumbing in XLA) ---
    x_cl = jnp.transpose(x_pad.reshape(N, c_in_p, HW), (1, 0, 2)).reshape(c_in_p, N * HW)

    # --- precompute the 9 SAME-padding boundary masks on the host ----------------
    q = jnp.arange(HW, dtype=jnp.int32)
    hh, ww = q // W, q % W
    mask_rows = []
    for dh in (-1, 0, 1):
        for dw in (-1, 0, 1):
            m = (hh + dh >= 0) & (hh + dh < H) & (ww + dw >= 0) & (ww + dw < W)
            mask_rows.append(m)
    masks = jnp.stack(mask_rows).astype(jnp.float32)              # (9, HW)
    masks = jnp.tile(masks, (1, n_blk)).reshape(9, 1, L)          # (9, 1, n_blk*HW)

    # --- cost hint so XLA schedules the tiny custom call sensibly ----------------
    flops = 2 * N * HW * (c_mid_p * 9 * c_in_p + c_out_p * 9 * c_mid_p)
    bytes_accessed = 4 * (x_cl.size + masks.size + w1_2d.size + b1_2d.size
                          + w2_2d.size + b2_2d.size + c_out_p * N * HW)
    cost = pl.CostEstimate(flops=flops, transcendentals=0,
                           bytes_accessed=bytes_accessed)

    out = pl.pallas_call(
        functools.partial(fused_backbone_kernel, W=W),
        out_shape=jax.ShapeDtypeStruct((c_out_p, N * HW), x_nchw.dtype),
        grid=(num_blocks,),
        in_specs=[
            pl.BlockSpec((c_in_p, L), lambda i: (0, i)),          # activations block
            pl.BlockSpec((9, 1, L), lambda i: (0, 0, 0)),          # precomputed masks
            pl.BlockSpec((c_mid_p, 9 * c_in_p), lambda i: (0, 0)),
            pl.BlockSpec((c_mid_p, 1), lambda i: (0, 0)),
            pl.BlockSpec((c_out_p, 9 * c_mid_p), lambda i: (0, 0)),
            pl.BlockSpec((c_out_p, 1), lambda i: (0, 0)),
        ],
        out_specs=pl.BlockSpec((c_out_p, L), lambda i: (0, i)),
        compiler_params=pltpu.CompilerParams(
            dimension_semantics=("parallel",)),
        cost_estimate=cost,
    )(x_cl, masks, w1_2d, b1_2d, w2_2d, b2_2d)

    # (Cout_p, N*HW) -> (N, Cout, H, W); layout plumbing + drop channel padding.
    out = out.reshape(c_out_p, N, H, W).transpose(1, 0, 2, 3)
    return out[:, :c_out]


# -----------------------------------------------------------------------------
# Pure-JAX reference (correctness check).
# -----------------------------------------------------------------------------
def reference_forward(x_nchw, params):
    x = jnp.transpose(x_nchw, (0, 2, 3, 1))
    dn = ("NHWC", "HWIO", "NHWC")
    h = lax.conv_general_dilated(x, params["w1"], (1, 1), "SAME",
                                 dimension_numbers=dn)
    h = jnp.maximum(h + params["b1"], 0.0)
    h = lax.conv_general_dilated(h, params["w2"], (1, 1), "SAME",
                                 dimension_numbers=dn)
    h = jnp.maximum(h + params["b2"], 0.0)
    return jnp.transpose(h, (0, 3, 1, 2))


if __name__ == "__main__":
    key = jax.random.PRNGKey(0)
    kx, kp = jax.random.split(key)

    # Small shapes consistent with an image backbone: NCHW (batch=2, C=4, H=W=16).
    x = jax.random.normal(kx, (2, 4, 16, 16), jnp.float32)
    params = init_backbone_params(kp, c_in=4, c_mid=8, c_out=16)

    out = backbone_wrapper_forward(x, params)
    out = jax.block_until_ready(out)

    ref = reference_forward(x, params)
    assert out.shape == ref.shape, (out.shape, ref.shape)
    assert jnp.allclose(out, ref, rtol=1e-4, atol=1e-4), "mismatch vs reference"

    print("KERNEL_OK")
</pallas_src>

<mosaic_0001>
module attributes {stable_mosaic.version = 11 : i64} {
  func.func @fused_backbone_kernel(%arg0: i32, %arg1: memref<8x512xf32, #tpu.memory_space<vmem>>, %arg2: memref<9x1x512xf32, #tpu.memory_space<vmem>>, %arg3: memref<8x72xf32, #tpu.memory_space<vmem>>, %arg4: memref<8x1xf32, #tpu.memory_space<vmem>>, %arg5: memref<16x72xf32, #tpu.memory_space<vmem>>, %arg6: memref<16x1xf32, #tpu.memory_space<vmem>>, %arg7: memref<16x512xf32, #tpu.memory_space<vmem>>) attributes {dimension_semantics = [#tpu.dimension_semantics<parallel>], iteration_bounds = array<i64: 1>, scalar_prefetch = 0 : i64, scratch_operands = 0 : i64, tpu.core_type = #tpu.core_type<tc>, window_params = [{transform_indices = @transform_0, window_bounds = array<i64: 8, 512>}, {pipeline_mode = #tpu.pipeline_mode<synchronous>, transform_indices = @transform_1, window_bounds = array<i64: 9, 1, 512>}, {pipeline_mode = #tpu.pipeline_mode<synchronous>, transform_indices = @transform_2, window_bounds = array<i64: 8, 72>}, {pipeline_mode = #tpu.pipeline_mode<synchronous>, transform_indices = @transform_3, window_bounds = array<i64: 8, 1>}, {pipeline_mode = #tpu.pipeline_mode<synchronous>, transform_indices = @transform_4, window_bounds = array<i64: 16, 72>}, {pipeline_mode = #tpu.pipeline_mode<synchronous>, transform_indices = @transform_5, window_bounds = array<i64: 16, 1>}, {transform_indices = @transform_6, window_bounds = array<i64: 16, 512>}]} {
    %c0 = arith.constant 0 : index
    %c0_0 = arith.constant 0 : index
    %0 = vector.load %arg1[%c0, %c0_0] : memref<8x512xf32, #tpu.memory_space<vmem>>, vector<8x512xf32>
    %c0_1 = arith.constant 0 : index
    %c0_2 = arith.constant 0 : index
    %1 = vector.load %arg3[%c0_1, %c0_2] : memref<8x72xf32, #tpu.memory_space<vmem>>, vector<8x72xf32>
    %c17_i32 = arith.constant 17 : i32
    %2 = tpu.dynamic_rotate %0 by %c17_i32 dim 1 : vector<8x512xf32>, i32 -> vector<8x512xf32>
    %c0_3 = arith.constant 0 : index
    %c0_4 = arith.constant 0 : index
    %c0_5 = arith.constant 0 : index
    %3 = vector.load %arg2[%c0_3, %c0_4, %c0_5] : memref<9x1x512xf32, #tpu.memory_space<vmem>>, vector<1x1x512xf32>
    %4 = vector.shape_cast %3 : vector<1x1x512xf32> to vector<1x512xf32>
    %5 = vector.broadcast %4 : vector<1x512xf32> to vector<8x512xf32>
    %6 = arith.mulf %2, %5 : vector<8x512xf32>
    %c16_i32 = arith.constant 16 : i32
    %7 = tpu.dynamic_rotate %0 by %c16_i32 dim 1 : vector<8x512xf32>, i32 -> vector<8x512xf32>
    %c1 = arith.constant 1 : index
    %c0_6 = arith.constant 0 : index
    %c0_7 = arith.constant 0 : index
    %8 = vector.load %arg2[%c1, %c0_6, %c0_7] : memref<9x1x512xf32, #tpu.memory_space<vmem>>, vector<1x1x512xf32>
    %9 = vector.shape_cast %8 : vector<1x1x512xf32> to vector<1x512xf32>
    %10 = vector.broadcast %9 : vector<1x512xf32> to vector<8x512xf32>
    %11 = arith.mulf %7, %10 : vector<8x512xf32>
    %c15_i32 = arith.constant 15 : i32
    %12 = tpu.dynamic_rotate %0 by %c15_i32 dim 1 : vector<8x512xf32>, i32 -> vector<8x512xf32>
    %c2 = arith.constant 2 : index
    %c0_8 = arith.constant 0 : index
    %c0_9 = arith.constant 0 : index
    %13 = vector.load %arg2[%c2, %c0_8, %c0_9] : memref<9x1x512xf32, #tpu.memory_space<vmem>>, vector<1x1x512xf32>
    %14 = vector.shape_cast %13 : vector<1x1x512xf32> to vector<1x512xf32>
    %15 = vector.broadcast %14 : vector<1x512xf32> to vector<8x512xf32>
    %16 = arith.mulf %12, %15 : vector<8x512xf32>
    %c1_i32 = arith.constant 1 : i32
    %17 = tpu.dynamic_rotate %0 by %c1_i32 dim 1 : vector<8x512xf32>, i32 -> vector<8x512xf32>
    %c3 = arith.constant 3 : index
    %c0_10 = arith.constant 0 : index
    %c0_11 = arith.constant 0 : index
    %18 = vector.load %arg2[%c3, %c0_10, %c0_11] : memref<9x1x512xf32, #tpu.memory_space<vmem>>, vector<1x1x512xf32>
    %19 = vector.shape_cast %18 : vector<1x1x512xf32> to vector<1x512xf32>
    %20 = vector.broadcast %19 : vector<1x512xf32> to vector<8x512xf32>
    %21 = arith.mulf %17, %20 : vector<8x512xf32>
    %c4 = arith.constant 4 : index
    %c0_12 = arith.constant 0 : index
    %c0_13 = arith.constant 0 : index
    %22 = vector.load %arg2[%c4, %c0_12, %c0_13] : memref<9x1x512xf32, #tpu.memory_space<vmem>>, vector<1x1x512xf32>
    %23 = vector.shape_cast %22 : vector<1x1x512xf32> to vector<1x512xf32>
    %24 = vector.broadcast %23 : vector<1x512xf32> to vector<8x512xf32>
    %25 = arith.mulf %0, %24 : vector<8x512xf32>
    %c511_i32 = arith.constant 511 : i32
    %26 = tpu.dynamic_rotate %0 by %c511_i32 dim 1 : vector<8x512xf32>, i32 -> vector<8x512xf32>
    %c5 = arith.constant 5 : index
    %c0_14 = arith.constant 0 : index
    %c0_15 = arith.constant 0 : index
    %27 = vector.load %arg2[%c5, %c0_14, %c0_15] : memref<9x1x512xf32, #tpu.memory_space<vmem>>, vector<1x1x512xf32>
    %28 = vector.shape_cast %27 : vector<1x1x512xf32> to vector<1x512xf32>
    %29 = vector.broadcast %28 : vector<1x512xf32> to vector<8x512xf32>
    %30 = arith.mulf %26, %29 : vector<8x512xf32>
    %c497_i32 = arith.constant 497 : i32
    %31 = tpu.dynamic_rotate %0 by %c497_i32 dim 1 : vector<8x512xf32>, i32 -> vector<8x512xf32>
    %c6 = arith.constant 6 : index
    %c0_16 = arith.constant 0 : index
    %c0_17 = arith.constant 0 : index
    %32 = vector.load %arg2[%c6, %c0_16, %c0_17] : memref<9x1x512xf32, #tpu.memory_space<vmem>>, vector<1x1x512xf32>
    %33 = vector.shape_cast %32 : vector<1x1x512xf32> to vector<1x512xf32>
    %34 = vector.broadcast %33 : vector<1x512xf32> to vector<8x512xf32>
    %35 = arith.mulf %31, %34 : vector<8x512xf32>
    %c496_i32 = arith.constant 496 : i32
    %36 = tpu.dynamic_rotate %0 by %c496_i32 dim 1 : vector<8x512xf32>, i32 -> vector<8x512xf32>
    %c7 = arith.constant 7 : index
    %c0_18 = arith.constant 0 : index
    %c0_19 = arith.constant 0 : index
    %37 = vector.load %arg2[%c7, %c0_18, %c0_19] : memref<9x1x512xf32, #tpu.memory_space<vmem>>, vector<1x1x512xf32>
    %38 = vector.shape_cast %37 : vector<1x1x512xf32> to vector<1x512xf32>
    %39 = vector.broadcast %38 : vector<1x512xf32> to vector<8x512xf32>
    %40 = arith.mulf %36, %39 : vector<8x512xf32>
    %c495_i32 = arith.constant 495 : i32
    %41 = tpu.dynamic_rotate %0 by %c495_i32 dim 1 : vector<8x512xf32>, i32 -> vector<8x512xf32>
    %c8 = arith.constant 8 : index
    %c0_20 = arith.constant 0 : index
    %c0_21 = arith.constant 0 : index
    %42 = vector.load %arg2[%c8, %c0_20, %c0_21] : memref<9x1x512xf32, #tpu.memory_space<vmem>>, vector<1x1x512xf32>
    %43 = vector.shape_cast %42 : vector<1x1x512xf32> to vector<1x512xf32>
    %44 = vector.broadcast %43 : vector<1x512xf32> to vector<8x512xf32>
    %45 = arith.mulf %41, %44 : vector<8x512xf32>
    %46 = tpu.concatenate %6, %11, %16, %21, %25, %30, %35, %40, %45 in 0 : vector<8x512xf32>, vector<8x512xf32>, vector<8x512xf32>, vector<8x512xf32>, vector<8x512xf32>, vector<8x512xf32>, vector<8x512xf32>, vector<8x512xf32>, vector<8x512xf32> -> vector<72x512xf32>
    %cst = arith.constant dense<0.000000e+00> : vector<8x512xf32>
    %47 = tpu.matmul %1, %46, %cst {dimension_numbers = #tpu.dot_dimension_numbers<[1], [0], [0], [1], [0, 0, 1, 1], [], []>} : vector<8x72xf32>, vector<72x512xf32>, vector<8x512xf32> -> vector<8x512xf32>
    %c0_22 = arith.constant 0 : index
    %c0_23 = arith.constant 0 : index
    %48 = vector.load %arg4[%c0_22, %c0_23] : memref<8x1xf32, #tpu.memory_space<vmem>>, vector<8x1xf32>
    %49 = vector.broadcast %48 : vector<8x1xf32> to vector<8x512xf32>
    %50 = arith.addf %47, %49 : vector<8x512xf32>
    %cst_24 = arith.constant 0.000000e+00 : f32
    %51 = vector.broadcast %cst_24 : f32 to vector<8x512xf32>
    %52 = arith.maximumf %50, %51 : vector<8x512xf32>
    %c0_25 = arith.constant 0 : index
    %c0_26 = arith.constant 0 : index
    %53 = vector.load %arg5[%c0_25, %c0_26] : memref<16x72xf32, #tpu.memory_space<vmem>>, vector<16x72xf32>
    %c17_i32_27 = arith.constant 17 : i32
    %54 = tpu.dynamic_rotate %52 by %c17_i32_27 dim 1 : vector<8x512xf32>, i32 -> vector<8x512xf32>
    %c0_28 = arith.constant 0 : index
    %c0_29 = arith.constant 0 : index
    %c0_30 = arith.constant 0 : index
    %55 = vector.load %arg2[%c0_28, %c0_29, %c0_30] : memref<9x1x512xf32, #tpu.memory_space<vmem>>, vector<1x1x512xf32>
    %56 = vector.shape_cast %55 : vector<1x1x512xf32> to vector<1x512xf32>
    %57 = vector.broadcast %56 : vector<1x512xf32> to vector<8x512xf32>
    %58 = arith.mulf %54, %57 : vector<8x512xf32>
    %c16_i32_31 = arith.constant 16 : i32
    %59 = tpu.dynamic_rotate %52 by %c16_i32_31 dim 1 : vector<8x512xf32>, i32 -> vector<8x512xf32>
    %c1_32 = arith.constant 1 : index
    %c0_33 = arith.constant 0 : index
    %c0_34 = arith.constant 0 : index
    %60 = vector.load %arg2[%c1_32, %c0_33, %c0_34] : memref<9x1x512xf32, #tpu.memory_space<vmem>>, vector<1x1x512xf32>
    %61 = vector.shape_cast %60 : vector<1x1x512xf32> to vector<1x512xf32>
    %62 = vector.broadcast %61 : vector<1x512xf32> to vector<8x512xf32>
    %63 = arith.mulf %59, %62 : vector<8x512xf32>
    %c15_i32_35 = arith.constant 15 : i32
    %64 = tpu.dynamic_rotate %52 by %c15_i32_35 dim 1 : vector<8x512xf32>, i32 -> vector<8x512xf32>
    %c2_36 = arith.constant 2 : index
    %c0_37 = arith.constant 0 : index
    %c0_38 = arith.constant 0 : index
    %65 = vector.load %arg2[%c2_36, %c0_37, %c0_38] : memref<9x1x512xf32, #tpu.memory_space<vmem>>, vector<1x1x512xf32>
    %66 = vector.shape_cast %65 : vector<1x1x512xf32> to vector<1x512xf32>
    %67 = vector.broadcast %66 : vector<1x512xf32> to vector<8x512xf32>
    %68 = arith.mulf %64, %67 : vector<8x512xf32>
    %c1_i32_39 = arith.constant 1 : i32
    %69 = tpu.dynamic_rotate %52 by %c1_i32_39 dim 1 : vector<8x512xf32>, i32 -> vector<8x512xf32>
    %c3_40 = arith.constant 3 : index
    %c0_41 = arith.constant 0 : index
    %c0_42 = arith.constant 0 : index
    %70 = vector.load %arg2[%c3_40, %c0_41, %c0_42] : memref<9x1x512xf32, #tpu.memory_space<vmem>>, vector<1x1x512xf32>
    %71 = vector.shape_cast %70 : vector<1x1x512xf32> to vector<1x512xf32>
    %72 = vector.broadcast %71 : vector<1x512xf32> to vector<8x512xf32>
    %73 = arith.mulf %69, %72 : vector<8x512xf32>
    %c4_43 = arith.constant 4 : index
    %c0_44 = arith.constant 0 : index
    %c0_45 = arith.constant 0 : index
    %74 = vector.load %arg2[%c4_43, %c0_44, %c0_45] : memref<9x1x512xf32, #tpu.memory_space<vmem>>, vector<1x1x512xf32>
    %75 = vector.shape_cast %74 : vector<1x1x512xf32> to vector<1x512xf32>
    %76 = vector.broadcast %75 : vector<1x512xf32> to vector<8x512xf32>
    %77 = arith.mulf %52, %76 : vector<8x512xf32>
    %c511_i32_46 = arith.constant 511 : i32
    %78 = tpu.dynamic_rotate %52 by %c511_i32_46 dim 1 : vector<8x512xf32>, i32 -> vector<8x512xf32>
    %c5_47 = arith.constant 5 : index
    %c0_48 = arith.constant 0 : index
    %c0_49 = arith.constant 0 : index
    %79 = vector.load %arg2[%c5_47, %c0_48, %c0_49] : memref<9x1x512xf32, #tpu.memory_space<vmem>>, vector<1x1x512xf32>
    %80 = vector.shape_cast %79 : vector<1x1x512xf32> to vector<1x512xf32>
    %81 = vector.broadcast %80 : vector<1x512xf32> to vector<8x512xf32>
    %82 = arith.mulf %78, %81 : vector<8x512xf32>
    %c497_i32_50 = arith.constant 497 : i32
    %83 = tpu.dynamic_rotate %52 by %c497_i32_50 dim 1 : vector<8x512xf32>, i32 -> vector<8x512xf32>
    %c6_51 = arith.constant 6 : index
    %c0_52 = arith.constant 0 : index
    %c0_53 = arith.constant 0 : index
    %84 = vector.load %arg2[%c6_51, %c0_52, %c0_53] : memref<9x1x512xf32, #tpu.memory_space<vmem>>, vector<1x1x512xf32>
    %85 = vector.shape_cast %84 : vector<1x1x512xf32> to vector<1x512xf32>
    %86 = vector.broadcast %85 : vector<1x512xf32> to vector<8x512xf32>
    %87 = arith.mulf %83, %86 : vector<8x512xf32>
    %c496_i32_54 = arith.constant 496 : i32
    %88 = tpu.dynamic_rotate %52 by %c496_i32_54 dim 1 : vector<8x512xf32>, i32 -> vector<8x512xf32>
    %c7_55 = arith.constant 7 : index
    %c0_56 = arith.constant 0 : index
    %c0_57 = arith.constant 0 : index
    %89 = vector.load %arg2[%c7_55, %c0_56, %c0_57] : memref<9x1x512xf32, #tpu.memory_space<vmem>>, vector<1x1x512xf32>
    %90 = vector.shape_cast %89 : vector<1x1x512xf32> to vector<1x512xf32>
    %91 = vector.broadcast %90 : vector<1x512xf32> to vector<8x512xf32>
    %92 = arith.mulf %88, %91 : vector<8x512xf32>
    %c495_i32_58 = arith.constant 495 : i32
    %93 = tpu.dynamic_rotate %52 by %c495_i32_58 dim 1 : vector<8x512xf32>, i32 -> vector<8x512xf32>
    %c8_59 = arith.constant 8 : index
    %c0_60 = arith.constant 0 : index
    %c0_61 = arith.constant 0 : index
    %94 = vector.load %arg2[%c8_59, %c0_60, %c0_61] : memref<9x1x512xf32, #tpu.memory_space<vmem>>, vector<1x1x512xf32>
    %95 = vector.shape_cast %94 : vector<1x1x512xf32> to vector<1x512xf32>
    %96 = vector.broadcast %95 : vector<1x512xf32> to vector<8x512xf32>
    %97 = arith.mulf %93, %96 : vector<8x512xf32>
    %98 = tpu.concatenate %58, %63, %68, %73, %77, %82, %87, %92, %97 in 0 : vector<8x512xf32>, vector<8x512xf32>, vector<8x512xf32>, vector<8x512xf32>, vector<8x512xf32>, vector<8x512xf32>, vector<8x512xf32>, vector<8x512xf32>, vector<8x512xf32> -> vector<72x512xf32>
    %cst_62 = arith.constant dense<0.000000e+00> : vector<16x512xf32>
    %99 = tpu.matmul %53, %98, %cst_62 {dimension_numbers = #tpu.dot_dimension_numbers<[1], [0], [0], [1], [0, 0, 1, 1], [], []>} : vector<16x72xf32>, vector<72x512xf32>, vector<16x512xf32> -> vector<16x512xf32>
    %c0_63 = arith.constant 0 : index
    %c0_64 = arith.constant 0 : index
    %100 = vector.load %arg6[%c0_63, %c0_64] : memref<16x1xf32, #tpu.memory_space<vmem>>, vector<16x1xf32>
    %101 = vector.broadcast %100 : vector<16x1xf32> to vector<16x512xf32>
    %102 = arith.addf %99, %101 : vector<16x512xf32>
    %cst_65 = arith.constant 0.000000e+00 : f32
    %103 = vector.broadcast %cst_65 : f32 to vector<16x512xf32>
    %104 = arith.maximumf %102, %103 : vector<16x512xf32>
    %c0_66 = arith.constant 0 : index
    %c0_67 = arith.constant 0 : index
    %105 = vector.load %arg7[%c0_66, %c0_67] : memref<16x512xf32, #tpu.memory_space<vmem>>, vector<16x512xf32>
    tpu.vector_store %arg7[%c0_66, %c0_67], %104 {strides = array<i32>} : memref<16x512xf32, #tpu.memory_space<vmem>>, vector<16x512xf32>,
    return
  }
  func.func @transform_0(%arg0: i32) -> (i32, i32) {
    %c0_i32 = arith.constant 0 : i32
    %c0_i32_0 = arith.constant 0 : i32
    return %c0_i32, %arg0 : i32, i32
  }
  func.func @transform_1(%arg0: i32) -> (i32, i32, i32) {
    %c0_i32 = arith.constant 0 : i32
    %c0_i32_0 = arith.constant 0 : i32
    %c0_i32_1 = arith.constant 0 : i32
    %c0_i32_2 = arith.constant 0 : i32
    return %c0_i32, %c0_i32_0, %c0_i32_1 : i32, i32, i32
  }
  func.func @transform_2(%arg0: i32) -> (i32, i32) {
    %c0_i32 = arith.constant 0 : i32
    %c0_i32_0 = arith.constant 0 : i32
    %c0_i32_1 = arith.constant 0 : i32
    return %c0_i32, %c0_i32_0 : i32, i32
  }
  func.func @transform_3(%arg0: i32) -> (i32, i32) {
    %c0_i32 = arith.constant 0 : i32
    %c0_i32_0 = arith.constant 0 : i32
    %c0_i32_1 = arith.constant 0 : i32
    return %c0_i32, %c0_i32_0 : i32, i32
  }
  func.func @transform_4(%arg0: i32) -> (i32, i32) {
    %c0_i32 = arith.constant 0 : i32
    %c0_i32_0 = arith.constant 0 : i32
    %c0_i32_1 = arith.constant 0 : i32
    return %c0_i32, %c0_i32_0 : i32, i32
  }
  func.func @transform_5(%arg0: i32) -> (i32, i32) {
    %c0_i32 = arith.constant 0 : i32
    %c0_i32_0 = arith.constant 0 : i32
    %c0_i32_1 = arith.constant 0 : i32
    return %c0_i32, %c0_i32_0 : i32, i32
  }
  func.func @transform_6(%arg0: i32) -> (i32, i32) {
    %c0_i32 = arith.constant 0 : i32
    %c0_i32_0 = arith.constant 0 : i32
    return %c0_i32, %arg0 : i32, i32
  }
}

</mosaic_0001>

<llo_original>
// kernel: backbone_wrapper_forward.1
$region0: #{backbone_wrapper_forward.1}
  #allocation0 [shape = 'u32[]', space=smem, size = 0x4, offset = 0x4, fixed_abs, tag = 'smem constant byte address 0x4 - core index']
  #allocation1 [shape = 'u32[72,128]{1,0:T(1,128)}', space=vmem, size = 0x9000, scoped, tag = 'internal scratch']
  %s0 = inlined_call_operand.vmem [shape: f32[8,512], index: 0, kind: input, shape index: {}]
  %s1 = inlined_call_operand.vmem [shape: f32[9,1,512], index: 1, kind: input, shape index: {}]
  %s2 = inlined_call_operand.vmem [shape: f32[8,72], index: 2, kind: input, shape index: {}]
  %s3 = inlined_call_operand.vmem [shape: f32[8,1], index: 3, kind: input, shape index: {}]
  %s4 = inlined_call_operand.vmem [shape: f32[16,72], index: 4, kind: input, shape index: {}]
  %s5 = inlined_call_operand.vmem [shape: f32[16,1], index: 5, kind: input, shape index: {}]
  %s6 = inlined_call_operand.vmem [shape: f32[16,512], index: 6, kind: output, shape index: {}]
  %s7 = sld [smem:[#allocation0]]
  $region34: #{backbone_wrapper_forward.1} parent=0
    _
  %s9 = ssub.s32 1, %s7
  %s10 = scalar_select 0, %s9, %s7
  // Predicated region
  $region2: #{backbone_wrapper_forward.1} parent=0 // pred_check
    _
  $region3: #{backbone_wrapper_forward.1} parent=0 // pred_check_branch
    %12 = sbr.rel (0) target = $region5
  $region4: #{backbone_wrapper_forward.1} parent=0 // pred_region
    _
  $region5: #{backbone_wrapper_forward.1} parent=0 // pred_fallthru
    _
  // Predicated region
  $region6: #{backbone_wrapper_forward.1} parent=0 // pred_check
    _
  $region7: #{backbone_wrapper_forward.1} parent=0 // pred_check_branch
    %14 = sbr.rel (0) target = $region9
  $region8: #{backbone_wrapper_forward.1} parent=0 // pred_region
    _
  $region9: #{backbone_wrapper_forward.1} parent=0 // pred_fallthru
    _
  // Predicated region
  $region10: #{backbone_wrapper_forward.1} parent=0 // pred_check
    _
  $region11: #{backbone_wrapper_forward.1} parent=0 // pred_check_branch
    %16 = sbr.rel (0) target = $region13
  $region12: #{backbone_wrapper_forward.1} parent=0 // pred_region
    _
  $region13: #{backbone_wrapper_forward.1} parent=0 // pred_fallthru
    _
  // Predicated region
  $region14: #{backbone_wrapper_forward.1} parent=0 // pred_check
    _
  $region15: #{backbone_wrapper_forward.1} parent=0 // pred_check_branch
    %18 = sbr.rel (0) target = $region17
  $region16: #{backbone_wrapper_forward.1} parent=0 // pred_region
    _
  $region17: #{backbone_wrapper_forward.1} parent=0 // pred_fallthru
    _
  // Predicated region
  $region18: #{backbone_wrapper_forward.1} parent=0 // pred_check
    _
  $region19: #{backbone_wrapper_forward.1} parent=0 // pred_check_branch
    %20 = sbr.rel (0) target = $region21
  $region20: #{backbone_wrapper_forward.1} parent=0 // pred_region
    _
  $region21: #{backbone_wrapper_forward.1} parent=0 // pred_fallthru
    _
  // Predicated region
  $region22: #{backbone_wrapper_forward.1} parent=0 // pred_check
    _
  $region23: #{backbone_wrapper_forward.1} parent=0 // pred_check_branch
    %22 = sbr.rel (0) target = $region25
  $region24: #{backbone_wrapper_forward.1} parent=0 // pred_region
    _
  $region25: #{backbone_wrapper_forward.1} parent=0 // pred_fallthru
    _
  %v23 = vld [vmem:[%s0] sm:$0xff]
  %v24 = vld [vmem:[%s0 + $0x8] sm:$0xff]
  %v25 = vld [vmem:[%s0 + $0x10] sm:$0xff]
  %v26 = vld [vmem:[%s0 + $0x18] sm:$0xff]
  %v27 = vld [vmem:[%s2] sm:$0xff]
  %28 = vrot.lane.b32.xlu0 %v23, 17
  %v29 = vpop.permute.xlu0 %28
  %30 = vrot.lane.b32.xlu0 %v24, 17
  %v31 = vpop.permute.xlu0 %30
  %32 = vrot.lane.b32.xlu0 %v25, 17
  %v33 = vpop.permute.xlu0 %32
  %34 = vrot.lane.b32.xlu0 %v26, 17
  %v35 = vpop.permute.xlu0 %34
  %v36 = vlaneseq
  %v37 = vand.u32 %v36, 127
  %vm38 = vcmp.lt.s32.totalorder %v37, 17
  %v39 = vsel %vm38, %v33, %v35
  %v40 = vsel %vm38, %v31, %v33
  %v41 = vsel %vm38, %v29, %v31
  %v42 = vsel %vm38, %v35, %v29
  %v43 = vld [vmem:[%s1] sm:$0xf]
  %v45 = vperm.slane %v43, 0
  %v46 = vperm.slane %v43, 1
  %v47 = vperm.slane %v43, 2
  %v48 = vperm.slane %v43, 3
  %v53 = vmul.f32 %v42, %v45
  %v54 = vmul.f32 %v41, %v46
  %v55 = vmul.f32 %v40, %v47
  %v56 = vmul.f32 %v39, %v48
  %57 = vrot.lane.b32.xlu0 %v23, 16
  %v58 = vpop.permute.xlu0 %57
  %59 = vrot.lane.b32.xlu0 %v24, 16
  %v60 = vpop.permute.xlu0 %59
  %61 = vrot.lane.b32.xlu0 %v25, 16
  %v62 = vpop.permute.xlu0 %61
  %63 = vrot.lane.b32.xlu0 %v26, 16
  %v64 = vpop.permute.xlu0 %63
  %vm65 = vcmp.lt.s32.totalorder %v37, 16
  %v66 = vsel %vm65, %v62, %v64
  %v67 = vsel %vm65, %v60, %v62
  %v68 = vsel %vm65, %v58, %v60
  %v69 = vsel %vm65, %v64, %v58
  %s70 = scalar_lea.vmem %s1, 4
  %v71 = vld [vmem:[%s70] sm:$0xf]
  %v73 = vperm.slane %v71, 0
  %v74 = vperm.slane %v71, 1
  %v75 = vperm.slane %v71, 2
  %v76 = vperm.slane %v71, 3
  %v81 = vmul.f32 %v69, %v73
  %v82 = vmul.f32 %v68, %v74
  %v83 = vmul.f32 %v67, %v75
  %v84 = vmul.f32 %v66, %v76
  %85 = vrot.lane.b32.xlu0 %v23, 15
  %v86 = vpop.permute.xlu0 %85
  %87 = vrot.lane.b32.xlu0 %v24, 15
  %v88 = vpop.permute.xlu0 %87
  %89 = vrot.lane.b32.xlu0 %v25, 15
  %v90 = vpop.permute.xlu0 %89
  %91 = vrot.lane.b32.xlu0 %v26, 15
  %v92 = vpop.permute.xlu0 %91
  %vm93 = vcmp.lt.s32.totalorder %v37, 15
  %v94 = vsel %vm93, %v90, %v92
  %v95 = vsel %vm93, %v88, %v90
  %v96 = vsel %vm93, %v86, %v88
  %v97 = vsel %vm93, %v92, %v86
  %s98 = scalar_lea.vmem %s1, 8
  %v99 = vld [vmem:[%s98] sm:$0xf]
  %v101 = vperm.slane %v99, 0
  %v102 = vperm.slane %v99, 1
  %v103 = vperm.slane %v99, 2
  %v104 = vperm.slane %v99, 3
  %v109 = vmul.f32 %v97, %v101
  %v110 = vmul.f32 %v96, %v102
  %v111 = vmul.f32 %v95, %v103
  %v112 = vmul.f32 %v94, %v104
  %113 = vrot.lane.b32.xlu0 %v23, 1
  %v114 = vpop.permute.xlu0 %113
  %115 = vrot.lane.b32.xlu0 %v24, 1
  %v116 = vpop.permute.xlu0 %115
  %117 = vrot.lane.b32.xlu0 %v25, 1
  %v118 = vpop.permute.xlu0 %117
  %119 = vrot.lane.b32.xlu0 %v26, 1
  %v120 = vpop.permute.xlu0 %119
  %vm121 = vcmp.lt.s32.totalorder %v37, 1
  %v122 = vsel %vm121, %v118, %v120
  %v123 = vsel %vm121, %v116, %v118
  %v124 = vsel %vm121, %v114, %v116
  %v125 = vsel %vm121, %v120, %v114
  %s126 = scalar_lea.vmem %s1, 12
  %v127 = vld [vmem:[%s126] sm:$0xf]
  %v129 = vperm.slane %v127, 0
  %v130 = vperm.slane %v127, 1
  %v131 = vperm.slane %v127, 2
  %v132 = vperm.slane %v127, 3
  %v137 = vmul.f32 %v125, %v129
  %v138 = vmul.f32 %v124, %v130
  %v139 = vmul.f32 %v123, %v131
  %v140 = vmul.f32 %v122, %v132
  %s141 = scalar_lea.vmem %s1, 16
  %v142 = vld [vmem:[%s141] sm:$0xf]
  %v144 = vperm.slane %v142, 0
  %v145 = vperm.slane %v142, 1
  %v146 = vperm.slane %v142, 2
  %v147 = vperm.slane %v142, 3
  %v152 = vmul.f32 %v23, %v144
  %v153 = vmul.f32 %v24, %v145
  %v154 = vmul.f32 %v25, %v146
  %v155 = vmul.f32 %v26, %v147
  %156 = vrot.lane.b32.xlu0 %v23, 127
  %v157 = vpop.permute.xlu0 %156
  %158 = vrot.lane.b32.xlu0 %v24, 127
  %v159 = vpop.permute.xlu0 %158
  %160 = vrot.lane.b32.xlu0 %v25, 127
  %v161 = vpop.permute.xlu0 %160
  %162 = vrot.lane.b32.xlu0 %v26, 127
  %v163 = vpop.permute.xlu0 %162
  %vm164 = vcmp.lt.s32.totalorder %v37, 127
  %v165 = vsel %vm164, %v161, %v163
  %v166 = vsel %vm164, %v159, %v161
  %v167 = vsel %vm164, %v157, %v159
  %v168 = vsel %vm164, %v163, %v157
  %s169 = scalar_lea.vmem %s1, 20
  %v170 = vld [vmem:[%s169] sm:$0xf]
  %v172 = vperm.slane %v170, 0
  %v173 = vperm.slane %v170, 1
  %v174 = vperm.slane %v170, 2
  %v175 = vperm.slane %v170, 3
  %v180 = vmul.f32 %v167, %v172
  %v181 = vmul.f32 %v166, %v173
  %v182 = vmul.f32 %v165, %v174
  %v183 = vmul.f32 %v168, %v175
  %184 = vrot.lane.b32.xlu0 %v23, 113
  %v185 = vpop.permute.xlu0 %184
  %186 = vrot.lane.b32.xlu0 %v24, 113
  %v187 = vpop.permute.xlu0 %186
  %188 = vrot.lane.b32.xlu0 %v25, 113
  %v189 = vpop.permute.xlu0 %188
  %190 = vrot.lane.b32.xlu0 %v26, 113
  %v191 = vpop.permute.xlu0 %190
  %vm192 = vcmp.lt.s32.totalorder %v37, 113
  %v193 = vsel %vm192, %v189, %v191
  %v194 = vsel %vm192, %v187, %v189
  %v195 = vsel %vm192, %v185, %v187
  %v196 = vsel %vm192, %v191, %v185
  %s197 = scalar_lea.vmem %s1, 24
  %v198 = vld [vmem:[%s197] sm:$0xf]
  %v200 = vperm.slane %v198, 0
  %v201 = vperm.slane %v198, 1
  %v202 = vperm.slane %v198, 2
  %v203 = vperm.slane %v198, 3
  %v208 = vmul.f32 %v195, %v200
  %v209 = vmul.f32 %v194, %v201
  %v210 = vmul.f32 %v193, %v202
  %v211 = vmul.f32 %v196, %v203
  %212 = vrot.lane.b32.xlu0 %v23, 112
  %v213 = vpop.permute.xlu0 %212
  %214 = vrot.lane.b32.xlu0 %v24, 112
  %v215 = vpop.permute.xlu0 %214
  %216 = vrot.lane.b32.xlu0 %v25, 112
  %v217 = vpop.permute.xlu0 %216
  %218 = vrot.lane.b32.xlu0 %v26, 112
  %v219 = vpop.permute.xlu0 %218
  %vm220 = vcmp.lt.s32.totalorder %v37, 112
  %v221 = vsel %vm220, %v217, %v219
  %v222 = vsel %vm220, %v215, %v217
  %v223 = vsel %vm220, %v213, %v215
  %v224 = vsel %vm220, %v219, %v213
  %s225 = scalar_lea.vmem %s1, 28
  %v226 = vld [vmem:[%s225] sm:$0xf]
  %v228 = vperm.slane %v226, 0
  %v229 = vperm.slane %v226, 1
  %v230 = vperm.slane %v226, 2
  %v231 = vperm.slane %v226, 3
  %v236 = vmul.f32 %v223, %v228
  %v237 = vmul.f32 %v222, %v229
  %v238 = vmul.f32 %v221, %v230
  %v239 = vmul.f32 %v224, %v231
  %240 = vrot.lane.b32.xlu0 %v23, 111
  %v241 = vpop.permute.xlu0 %240
  %242 = vrot.lane.b32.xlu0 %v24, 111
  %v243 = vpop.permute.xlu0 %242
  %244 = vrot.lane.b32.xlu0 %v25, 111
  %v245 = vpop.permute.xlu0 %244
  %246 = vrot.lane.b32.xlu0 %v26, 111
  %v247 = vpop.permute.xlu0 %246
  %vm248 = vcmp.lt.s32.totalorder %v37, 111
  %v249 = vsel %vm248, %v245, %v247
  %v250 = vsel %vm248, %v243, %v245
  %v251 = vsel %vm248, %v241, %v243
  %v252 = vsel %vm248, %v247, %v241
  %s253 = scalar_lea.vmem %s1, 32
  %v254 = vld [vmem:[%s253] sm:$0xf]
  %v256 = vperm.slane %v254, 0
  %v257 = vperm.slane %v254, 1
  %v258 = vperm.slane %v254, 2
  %v259 = vperm.slane %v254, 3
  %v264 = vmul.f32 %v251, %v256
  %v265 = vmul.f32 %v250, %v257
  %v266 = vmul.f32 %v249, %v258
  %v267 = vmul.f32 %v252, %v259
  %v268 = vld [vmem:[%s3] sm:$0xff]
  %270 = vset.pattern.permute.xlu0 0
  %271 = vperm.xlu0 %270, %v268
  %v272 = vpop.permute.xlu0 %271
  %vm274 = vcmask 588800
  %v276 = vsel %vm274, %v27, 0
  %278 = vmatpush.msra.mxu0 0.0
  %279 = vmatpush.msra.mxu0 0.0
  %280 = vmatpush.msra.mxu0 0.0
  %281 = vmatpush.msra.mxu0 0.0
  %282 = vmatpush.msra.mxu0 0.0
  %283 = vmatpush.msra.mxu0 0.0
  %284 = vmatpush.msra.mxu0 0.0
  %285 = vmatpush.msra.mxu0 %v264
  %286 = vmatpush.msra.mxu0 %v236
  %287 = vmatpush.msra.mxu0 %v208
  %288 = vmatpush.msra.mxu0 %v180
  %289 = vmatpush.msra.mxu0 %v152
  %290 = vmatpush.msra.mxu0 %v137
  %291 = vmatpush.msra.mxu0 %v109
  %292 = vmatpush.msra.mxu0 %v81
  %293 = vmatpush.msra.mxu0 %v53
  %294 = vmatmul.f32.gmra.mxu0 %v276
  %v295 = vpop.f32.mrf.mxu0
  %v296 = vadd.f32 %v272, %v295
  %297 = vdwg.mxu0
  %298 = vmatpush.msra.mxu0 0.0
  %299 = vmatpush.msra.mxu0 0.0
  %300 = vmatpush.msra.mxu0 0.0
  %301 = vmatpush.msra.mxu0 0.0
  %302 = vmatpush.msra.mxu0 0.0
  %303 = vmatpush.msra.mxu0 0.0
  %304 = vmatpush.msra.mxu0 0.0
  %305 = vmatpush.msra.mxu0 %v265
  %306 = vmatpush.msra.mxu0 %v237
  %307 = vmatpush.msra.mxu0 %v209
  %308 = vmatpush.msra.mxu0 %v181
  %309 = vmatpush.msra.mxu0 %v153
  %310 = vmatpush.msra.mxu0 %v138
  %311 = vmatpush.msra.mxu0 %v110
  %312 = vmatpush.msra.mxu0 %v82
  %313 = vmatpush.msra.mxu0 %v54
  %314 = vmatmul.f32.gmra.mxu0 %v276
  %v315 = vpop.f32.mrf.mxu0
  %v316 = vadd.f32 %v272, %v315
  %317 = vdwg.mxu0
  %318 = vmatpush.msra.mxu0 0.0
  %319 = vmatpush.msra.mxu0 0.0
  %320 = vmatpush.msra.mxu0 0.0
  %321 = vmatpush.msra.mxu0 0.0
  %322 = vmatpush.msra.mxu0 0.0
  %323 = vmatpush.msra.mxu0 0.0
  %324 = vmatpush.msra.mxu0 0.0
  %325 = vmatpush.msra.mxu0 %v266
  %326 = vmatpush.msra.mxu0 %v238
  %327 = vmatpush.msra.mxu0 %v210
  %328 = vmatpush.msra.mxu0 %v182
  %329 = vmatpush.msra.mxu0 %v154
  %330 = vmatpush.msra.mxu0 %v139
  %331 = vmatpush.msra.mxu0 %v111
  %332 = vmatpush.msra.mxu0 %v83
  %333 = vmatpush.msra.mxu0 %v55
  %334 = vmatmul.f32.gmra.mxu0 %v276
  %v335 = vpop.f32.mrf.mxu0
  %v336 = vadd.f32 %v272, %v335
  %337 = vdwg.mxu0
  %338 = vmatpush.msra.mxu0 0.0
  %339 = vmatpush.msra.mxu0 0.0
  %340 = vmatpush.msra.mxu0 0.0
  %341 = vmatpush.msra.mxu0 0.0
  %342 = vmatpush.msra.mxu0 0.0
  %343 = vmatpush.msra.mxu0 0.0
  %344 = vmatpush.msra.mxu0 0.0
  %345 = vmatpush.msra.mxu0 %v267
  %346 = vmatpush.msra.mxu0 %v239
  %347 = vmatpush.msra.mxu0 %v211
  %348 = vmatpush.msra.mxu0 %v183
  %349 = vmatpush.msra.mxu0 %v155
  %350 = vmatpush.msra.mxu0 %v140
  %351 = vmatpush.msra.mxu0 %v112
  %352 = vmatpush.msra.mxu0 %v84
  %353 = vmatpush.msra.mxu0 %v56
  %354 = vmatmul.f32.gmra.mxu0 %v276
  %v355 = vpop.f32.mrf.mxu0
  %v356 = vadd.f32 %v272, %v355
  %357 = vdwg.mxu0
  %v358 = vmax.f32 %v296, 0.0
  %v359 = vmax.f32 %v316, 0.0
  %v360 = vmax.f32 %v336, 0.0
  %v361 = vmax.f32 %v356, 0.0
  %v362 = vld [vmem:[%s4] sm:$0xff]
  %v363 = vld [vmem:[%s4 + $0x8] sm:$0xff]
  %364 = vrot.lane.b32.xlu0 %v358, 17
  %v365 = vpop.permute.xlu0 %364
  %366 = vrot.lane.b32.xlu0 %v359, 17
  %v367 = vpop.permute.xlu0 %366
  %368 = vrot.lane.b32.xlu0 %v360, 17
  %v369 = vpop.permute.xlu0 %368
  %370 = vrot.lane.b32.xlu0 %v361, 17
  %v371 = vpop.permute.xlu0 %370
  %v372 = vsel %vm38, %v369, %v371
  %v373 = vsel %vm38, %v367, %v369
  %v374 = vsel %vm38, %v365, %v367
  %v375 = vsel %vm38, %v371, %v365
  %v376 = vmul.f32 %v375, %v45
  %v377 = vmul.f32 %v374, %v46
  %v378 = vmul.f32 %v373, %v47
  %v379 = vmul.f32 %v372, %v48
  %380 = vrot.lane.b32.xlu0 %v358, 16
  %v381 = vpop.permute.xlu0 %380
  %382 = vrot.lane.b32.xlu0 %v359, 16
  %v383 = vpop.permute.xlu0 %382
  %384 = vrot.lane.b32.xlu0 %v360, 16
  %v385 = vpop.permute.xlu0 %384
  %386 = vrot.lane.b32.xlu0 %v361, 16
  %v387 = vpop.permute.xlu0 %386
  %v388 = vsel %vm65, %v385, %v387
  %v389 = vsel %vm65, %v383, %v385
  %v390 = vsel %vm65, %v381, %v383
  %v391 = vsel %vm65, %v387, %v381
  %v392 = vmul.f32 %v391, %v73
  %v393 = vmul.f32 %v390, %v74
  %v394 = vmul.f32 %v389, %v75
  %v395 = vmul.f32 %v388, %v76
  %396 = vrot.lane.b32.xlu0 %v358, 15
  %v397 = vpop.permute.xlu0 %396
  %398 = vrot.lane.b32.xlu0 %v359, 15
  %v399 = vpop.permute.xlu0 %398
  %400 = vrot.lane.b32.xlu0 %v360, 15
  %v401 = vpop.permute.xlu0 %400
  %402 = vrot.lane.b32.xlu0 %v361, 15
  %v403 = vpop.permute.xlu0 %402
  %v404 = vsel %vm93, %v401, %v403
  %v405 = vsel %vm93, %v399, %v401
  %v406 = vsel %vm93, %v397, %v399
  %v407 = vsel %vm93, %v403, %v397
  %v408 = vmul.f32 %v407, %v101
  %v409 = vmul.f32 %v406, %v102
  %v410 = vmul.f32 %v405, %v103
  %v411 = vmul.f32 %v404, %v104
  %412 = vrot.lane.b32.xlu0 %v358, 1
  %v413 = vpop.permute.xlu0 %412
  %414 = vrot.lane.b32.xlu0 %v359, 1
  %v415 = vpop.permute.xlu0 %414
  %416 = vrot.lane.b32.xlu0 %v360, 1
  %v417 = vpop.permute.xlu0 %416
  %418 = vrot.lane.b32.xlu0 %v361, 1
  %v419 = vpop.permute.xlu0 %418
  %v420 = vsel %vm121, %v417, %v419
  %v421 = vsel %vm121, %v415, %v417
  %v422 = vsel %vm121, %v413, %v415
  %v423 = vsel %vm121, %v419, %v413
  %v424 = vmul.f32 %v423, %v129
  %v425 = vmul.f32 %v422, %v130
  %v426 = vmul.f32 %v421, %v131
  %v427 = vmul.f32 %v420, %v132
  %v428 = vmul.f32 %v358, %v144
  %v429 = vmul.f32 %v359, %v145
  %v430 = vmul.f32 %v360, %v146
  %v431 = vmul.f32 %v361, %v147
  %432 = vrot.lane.b32.xlu0 %v358, 127
  %v433 = vpop.permute.xlu0 %432
  %434 = vrot.lane.b32.xlu0 %v359, 127
  %v435 = vpop.permute.xlu0 %434
  %436 = vrot.lane.b32.xlu0 %v360, 127
  %v437 = vpop.permute.xlu0 %436
  %438 = vrot.lane.b32.xlu0 %v361, 127
  %v439 = vpop.permute.xlu0 %438
  %v440 = vsel %vm164, %v437, %v439
  %v441 = vsel %vm164, %v435, %v437
  %v442 = vsel %vm164, %v433, %v435
  %v443 = vsel %vm164, %v439, %v433
  %v444 = vmul.f32 %v442, %v172
  %v445 = vmul.f32 %v441, %v173
  %v446 = vmul.f32 %v440, %v174
  %v447 = vmul.f32 %v443, %v175
  %448 = vrot.lane.b32.xlu0 %v358, 113
  %v449 = vpop.permute.xlu0 %448
  %450 = vrot.lane.b32.xlu0 %v359, 113
  %v451 = vpop.permute.xlu0 %450
  %452 = vrot.lane.b32.xlu0 %v360, 113
  %v453 = vpop.permute.xlu0 %452
  %454 = vrot.lane.b32.xlu0 %v361, 113
  %v455 = vpop.permute.xlu0 %454
  %v456 = vsel %vm192, %v453, %v455
  %v457 = vsel %vm192, %v451, %v453
  %v458 = vsel %vm192, %v449, %v451
  %v459 = vsel %vm192, %v455, %v449
  %v460 = vmul.f32 %v458, %v200
  %v461 = vmul.f32 %v457, %v201
  %v462 = vmul.f32 %v456, %v202
  %v463 = vmul.f32 %v459, %v203
  %464 = vrot.lane.b32.xlu0 %v358, 112
  %v465 = vpop.permute.xlu0 %464
  %466 = vrot.lane.b32.xlu0 %v359, 112
  %v467 = vpop.permute.xlu0 %466
  %468 = vrot.lane.b32.xlu0 %v360, 112
  %v469 = vpop.permute.xlu0 %468
  %470 = vrot.lane.b32.xlu0 %v361, 112
  %v471 = vpop.permute.xlu0 %470
  %v472 = vsel %vm220, %v469, %v471
  %v473 = vsel %vm220, %v467, %v469
  %v474 = vsel %vm220, %v465, %v467
  %v475 = vsel %vm220, %v471, %v465
  %v476 = vmul.f32 %v474, %v228
  %v477 = vmul.f32 %v473, %v229
  %v478 = vmul.f32 %v472, %v230
  %v479 = vmul.f32 %v475, %v231
  %480 = vrot.lane.b32.xlu0 %v358, 111
  %v481 = vpop.permute.xlu0 %480
  %482 = vrot.lane.b32.xlu0 %v359, 111
  %v483 = vpop.permute.xlu0 %482
  %484 = vrot.lane.b32.xlu0 %v360, 111
  %v485 = vpop.permute.xlu0 %484
  %486 = vrot.lane.b32.xlu0 %v361, 111
  %v487 = vpop.permute.xlu0 %486
  %v488 = vsel %vm248, %v485, %v487
  %v489 = vsel %vm248, %v483, %v485
  %v490 = vsel %vm248, %v481, %v483
  %v491 = vsel %vm248, %v487, %v481
  %v492 = vmul.f32 %v490, %v256
  %v493 = vmul.f32 %v489, %v257
  %v494 = vmul.f32 %v488, %v258
  %v495 = vmul.f32 %v491, %v259
  %v496 = vld [vmem:[%s5] sm:$0xff]
  %v497 = vld [vmem:[%s5 + $0x8] sm:$0xff]
  %499 = vset.pattern.permute.xlu0 0
  %500 = vperm.xlu0 %499, %v496
  %v501 = vpop.permute.xlu0 %500
  %504 = vset.pattern.permute.xlu0 0
  %505 = vperm.xlu0 %504, %v497
  %v506 = vpop.permute.xlu0 %505
  %v509 = vsel %vm274, %v362, 0
  %v512 = vsel %vm274, %v363, 0
  %514 = vmatpush.msra.mxu0 0.0
  %515 = vmatpush.msra.mxu0 0.0
  %516 = vmatpush.msra.mxu0 0.0
  %517 = vmatpush.msra.mxu0 0.0
  %518 = vmatpush.msra.mxu0 0.0
  %519 = vmatpush.msra.mxu0 0.0
  %520 = vmatpush.msra.mxu0 0.0
  %521 = vmatpush.msra.mxu0 %v492
  %522 = vmatpush.msra.mxu0 %v476
  %523 = vmatpush.msra.mxu0 %v460
  %524 = vmatpush.msra.mxu0 %v444
  %525 = vmatpush.msra.mxu0 %v428
  %526 = vmatpush.msra.mxu0 %v424
  %527 = vmatpush.msra.mxu0 %v408
  %528 = vmatpush.msra.mxu0 %v392
  %529 = vmatpush.msra.mxu0 %v376
  %530 = vmatmul.f32.gmra.mxu0 %v509
  %v531 = vpop.f32.mrf.mxu0
  %v532 = vadd.f32 %v501, %v531
  %533 = vmatmul.f32.gmra.mxu0 %v512
  %v534 = vpop.f32.mrf.mxu0
  %v535 = vadd.f32 %v506, %v534
  %536 = vdwg.mxu0
  %537 = vmatpush.msra.mxu0 0.0
  %538 = vmatpush.msra.mxu0 0.0
  %539 = vmatpush.msra.mxu0 0.0
  %540 = vmatpush.msra.mxu0 0.0
  %541 = vmatpush.msra.mxu0 0.0
  %542 = vmatpush.msra.mxu0 0.0
  %543 = vmatpush.msra.mxu0 0.0
  %544 = vmatpush.msra.mxu0 %v493
  %545 = vmatpush.msra.mxu0 %v477
  %546 = vmatpush.msra.mxu0 %v461
  %547 = vmatpush.msra.mxu0 %v445
  %548 = vmatpush.msra.mxu0 %v429
  %549 = vmatpush.msra.mxu0 %v425
  %550 = vmatpush.msra.mxu0 %v409
  %551 = vmatpush.msra.mxu0 %v393
  %552 = vmatpush.msra.mxu0 %v377
  %553 = vmatmul.f32.gmra.mxu0 %v509
  %v554 = vpop.f32.mrf.mxu0
  %v555 = vadd.f32 %v501, %v554
  %556 = vmatmul.f32.gmra.mxu0 %v512
  %v557 = vpop.f32.mrf.mxu0
  %v558 = vadd.f32 %v506, %v557
  %559 = vdwg.mxu0
  %560 = vmatpush.msra.mxu0 0.0
  %561 = vmatpush.msra.mxu0 0.0
  %562 = vmatpush.msra.mxu0 0.0
  %563 = vmatpush.msra.mxu0 0.0
  %564 = vmatpush.msra.mxu0 0.0
  %565 = vmatpush.msra.mxu0 0.0
  %566 = vmatpush.msra.mxu0 0.0
  %567 = vmatpush.msra.mxu0 %v494
  %568 = vmatpush.msra.mxu0 %v478
  %569 = vmatpush.msra.mxu0 %v462
  %570 = vmatpush.msra.mxu0 %v446
  %571 = vmatpush.msra.mxu0 %v430
  %572 = vmatpush.msra.mxu0 %v426
  %573 = vmatpush.msra.mxu0 %v410
  %574 = vmatpush.msra.mxu0 %v394
  %575 = vmatpush.msra.mxu0 %v378
  %576 = vmatmul.f32.gmra.mxu0 %v509
  %v577 = vpop.f32.mrf.mxu0
  %v578 = vadd.f32 %v501, %v577
  %579 = vmatmul.f32.gmra.mxu0 %v512
  %v580 = vpop.f32.mrf.mxu0
  %v581 = vadd.f32 %v506, %v580
  %582 = vdwg.mxu0
  %583 = vmatpush.msra.mxu0 0.0
  %584 = vmatpush.msra.mxu0 0.0
  %585 = vmatpush.msra.mxu0 0.0
  %586 = vmatpush.msra.mxu0 0.0
  %587 = vmatpush.msra.mxu0 0.0
  %588 = vmatpush.msra.mxu0 0.0
  %589 = vmatpush.msra.mxu0 0.0
  %590 = vmatpush.msra.mxu0 %v495
  %591 = vmatpush.msra.mxu0 %v479
  %592 = vmatpush.msra.mxu0 %v463
  %593 = vmatpush.msra.mxu0 %v447
  %594 = vmatpush.msra.mxu0 %v431
  %595 = vmatpush.msra.mxu0 %v427
  %596 = vmatpush.msra.mxu0 %v411
  %597 = vmatpush.msra.mxu0 %v395
  %598 = vmatpush.msra.mxu0 %v379
  %599 = vmatmul.f32.gmra.mxu0 %v509
  %v600 = vpop.f32.mrf.mxu0
  %v601 = vadd.f32 %v501, %v600
  %602 = vmatmul.f32.gmra.mxu0 %v512
  %v603 = vpop.f32.mrf.mxu0
  %v604 = vadd.f32 %v506, %v603
  %605 = vdwg.mxu0
  %v606 = vmax.f32 %v532, 0.0
  %v607 = vmax.f32 %v555, 0.0
  %v608 = vmax.f32 %v578, 0.0
  %v609 = vmax.f32 %v601, 0.0
  %v610 = vmax.f32 %v535, 0.0
  %v611 = vmax.f32 %v558, 0.0
  %v612 = vmax.f32 %v581, 0.0
  %v613 = vmax.f32 %v604, 0.0
  %614 = vst [vmem:[%s6] sm:$0xff] %v606
  %615 = vst [vmem:[%s6 + $0x8] sm:$0xff] %v607
  %616 = vst [vmem:[%s6 + $0x10] sm:$0xff] %v608
  %617 = vst [vmem:[%s6 + $0x18] sm:$0xff] %v609
  %618 = vst [vmem:[%s6 + $0x20] sm:$0xff] %v610
  %619 = vst [vmem:[%s6 + $0x28] sm:$0xff] %v611
  %620 = vst [vmem:[%s6 + $0x30] sm:$0xff] %v612
  %621 = vst [vmem:[%s6 + $0x38] sm:$0xff] %v613
  // Predicated region
  $region26: #{backbone_wrapper_forward.1} parent=0 // pred_check
    _
  $region27: #{backbone_wrapper_forward.1} parent=0 // pred_check_branch
    %623 = sbr.rel (0) target = $region29
  $region28: #{backbone_wrapper_forward.1} parent=0 // pred_region
    _
  $region29: #{backbone_wrapper_forward.1} parent=0 // pred_fallthru
    _
  // Predicated region
  $region30: #{backbone_wrapper_forward.1} parent=0 // pred_check
    _
  $region31: #{backbone_wrapper_forward.1} parent=0 // pred_check_branch
    %625 = sbr.rel (0) target = $region33
  $region32: #{backbone_wrapper_forward.1} parent=0 // pred_region
    _
  $region33: #{backbone_wrapper_forward.1} parent=0 // pred_fallthru
    _

</llo_original>
